<compile_context>
chip_gen: v7x
topology: tpu7x:2x2x1
jax: 0.10.0
libtpu: 0.0.40
codegen_flags: <defaults>
</compile_context>

<pallas_src>
import jax
import jax.numpy as jnp
from jax.experimental import pallas as pl
from jax.experimental.pallas import tpu as pltpu

IN_FEATURES = 28
HIDDEN = 28
OUT_FEATURES = 10


def _pick_tile_and_vmem_limit():
    """Per-generation batch tile + scoped VMEM limit (128-lane padding included).

    v7x : 64 MiB physical VMEM per TensorCore -> tile_b=8192 (~24 MiB), 48 MiB limit.
    v6e : 128 MiB physical (32 MiB default scoped) -> tile_b=16384, 80 MiB limit.
    v5e : 128 MiB physical (16 MiB default scoped), slower HBM so overhead
          amortizes sooner -> tile_b=8192, 48 MiB limit.
    Unknown chips fall back to the conservative v7x choice.
    """
    try:
        kind = jax.devices()[0].device_kind.lower()
    except Exception:  # pragma: no cover - defensive, e.g. no devices yet
        kind = ""
    if "v6" in kind:
        return 16384, 80 << 20
    if "v5" in kind:
        return 8192, 48 << 20
    return 8192, 48 << 20


def net_kernel(x_ref, w1_ref, b1_ref, w2_ref, b2_ref, out_ref):
    # f6: Layer(28, 28) forward == affine map (the KL term is training-only and
    # has no forward-pass effect).  Cast x to bf16 here, at the MXU input --
    # NOT in the wrapper -- so there is no extra HBM convert pass.
    x_bf16 = x_ref[...].astype(jnp.bfloat16)
    h = jnp.dot(x_bf16, w1_ref[...], preferred_element_type=jnp.float32)
    h = h + b1_ref[...]
    # relu6 (plain nn.ReLU in the module; the name is just 'relu6') -- f32 VPU.
    h = jnp.maximum(h, 0.0)
    # f7: FCDeterministic(28 -> 10).  Cast back to bf16 only at the MXU input;
    # keep all elementwise math in f32 (v5e has no bf16 VPU/EUP path).
    logits = jnp.dot(h.astype(w2_ref.dtype), w2_ref[...],
                     preferred_element_type=jnp.float32)
    logits = logits + b2_ref[...]
    # sig7: LogSoftmax(dim=-1), numerically stable, all in f32; quantize only
    # at the final store (bf16 output halves the HBM write stream).
    m = jnp.max(logits, axis=-1, keepdims=True)
    shifted = logits - m
    lse = jnp.log(jnp.sum(jnp.exp(shifted), axis=-1, keepdims=True))
    out_ref[...] = (shifted - lse).astype(out_ref.dtype)


def net_forward(x, w1, b1, w2, b2, *, tile_b=None, out_dtype=jnp.bfloat16):
    """x: (B, ...) -> flattened to (B, 28). Returns (B, 10) log-probabilities
    in `out_dtype` (bf16 by default; log-softmax itself is computed in f32)."""
    # img.view(B, -1) from the PyTorch forward.
    x = x.reshape(x.shape[0], -1)
    B = x.shape[0]
    assert x.shape[1] == IN_FEATURES

    # Weights are tiny (<2 KiB total) and read once per call -- a wrapper-side
    # bf16 cast is negligible.  x is left untouched (f32) and cast in-kernel.
    w1_bf16 = w1.astype(jnp.bfloat16)
    w2_bf16 = w2.astype(jnp.bfloat16)
    b1_f32 = b1.astype(jnp.float32)
    b2_f32 = b2.astype(jnp.float32)

    max_tile_b, vmem_limit = _pick_tile_and_vmem_limit()
    if tile_b is None:
        tile_b = max_tile_b

    # Batch tile: either the full batch (small B) or a multiple of 16 so bf16
    # rows pack cleanly into sublane groups with no ragged relayout.
    if B <= tile_b:
        tile_b = B
    else:
        tile_b = max(16, (tile_b // 16) * 16)
    grid = (pl.cdiv(B, tile_b),)

    x_bytes = jnp.dtype(x.dtype).itemsize
    out_bytes = jnp.dtype(out_dtype).itemsize
    cost = pl.CostEstimate(
        flops=2 * B * (IN_FEATURES * HIDDEN + HIDDEN * OUT_FEATURES),
        transcendentals=(OUT_FEATURES + 1) * B,  # exp per class + log per row
        bytes_accessed=B * (IN_FEATURES * x_bytes + OUT_FEATURES * out_bytes)
        + (IN_FEATURES * HIDDEN + HIDDEN * OUT_FEATURES) * 2  # bf16 weights
        + (HIDDEN + OUT_FEATURES) * 4,                        # f32 biases
    )

    return pl.pallas_call(
        net_kernel,
        out_shape=jax.ShapeDtypeStruct((B, OUT_FEATURES), out_dtype),
        grid=grid,
        in_specs=[
            # x: tiled over the batch axis -> double-buffered HBM<->VMEM DMA.
            pl.BlockSpec((tile_b, IN_FEATURES), lambda i: (i, 0)),
            # Weights/biases: constant index_map -> resident in VMEM across steps.
            pl.BlockSpec((IN_FEATURES, HIDDEN), lambda i: (0, 0)),
            pl.BlockSpec((1, HIDDEN), lambda i: (0, 0)),
            pl.BlockSpec((HIDDEN, OUT_FEATURES), lambda i: (0, 0)),
            pl.BlockSpec((1, OUT_FEATURES), lambda i: (0, 0)),
        ],
        out_specs=pl.BlockSpec((tile_b, OUT_FEATURES), lambda i: (i, 0)),
        compiler_params=pltpu.CompilerParams(
            dimension_semantics=("parallel",),  # lets v7x use both TensorCores
            vmem_limit_bytes=vmem_limit,
        ),
        cost_estimate=cost,
    )(x, w1_bf16, b1_f32, w2_bf16, b2_f32)


def init_params(key):
    """Deterministic parameter init (PyTorch-Linear-style uniform bounds)."""
    k1, k2, k3, k4 = jax.random.split(key, 4)
    bound1 = 1.0 / jnp.sqrt(IN_FEATURES)
    w1 = jax.random.uniform(k1, (IN_FEATURES, HIDDEN), jnp.float32, -bound1, bound1)
    b1 = jax.random.uniform(k2, (1, HIDDEN), jnp.float32, -bound1, bound1)
    bound2 = 1.0 / jnp.sqrt(HIDDEN)
    w2 = jax.random.uniform(k3, (HIDDEN, OUT_FEATURES), jnp.float32, -bound2, bound2)
    b2 = jax.random.uniform(k4, (1, OUT_FEATURES), jnp.float32, -bound2, bound2)
    return w1, b1, w2, b2


def _ref_forward(x, w1, b1, w2, b2):
    """Pure-JAX reference (same bf16 MXU-input quantization as the kernel),
    returned in f32."""
    x = x.reshape(x.shape[0], -1)
    h = jnp.dot(x.astype(jnp.bfloat16), w1.astype(jnp.bfloat16),
                preferred_element_type=jnp.float32) + b1.astype(jnp.float32)
    h = jnp.maximum(h, 0.0)
    logits = jnp.dot(h.astype(jnp.bfloat16), w2.astype(jnp.bfloat16),
                     preferred_element_type=jnp.float32) + b2.astype(jnp.float32)
    return jax.nn.log_softmax(logits, axis=-1)


if __name__ == "__main__":
    key = jax.random.PRNGKey(0)
    k_x, k_p = jax.random.split(key)

    # Net.forward does img.view(B, -1); the fc stack expects 28 features,
    # so the input is (B, 28) (already flat for the Higgs FC net).
    B = 2
    x = jax.random.normal(k_x, (B, IN_FEATURES), dtype=jnp.float32)
    w1, b1, w2, b2 = init_params(k_p)

    out = net_forward(x, w1, b1, w2, b2)
    out = jax.block_until_ready(out)

    # sanity 1: shape + log-softmax rows sum to 1 in prob space (bf16 output,
    # so use a bf16-appropriate tolerance).
    assert out.shape == (B, OUT_FEATURES)
    out_f32 = out.astype(jnp.float32)
    row_sums = jnp.sum(jnp.exp(out_f32), axis=-1)
    assert bool(jnp.all(jnp.abs(row_sums - 1.0) < 3e-2))

    # sanity 2: matches pure-JAX reference (bf16 output quantization tolerance).
    ref = _ref_forward(x, w1, b1, w2, b2)
    assert bool(jnp.all(jnp.abs(out_f32 - ref) < 5e-2))

    print("KERNEL_OK")
</pallas_src>

<mosaic_0001>
module attributes {stable_mosaic.version = 11 : i64} {
  func.func @net_kernel(%arg0: i32, %arg1: memref<2x28xf32, #tpu.memory_space<vmem>>, %arg2: memref<28x28xbf16, #tpu.memory_space<vmem>>, %arg3: memref<1x28xf32, #tpu.memory_space<vmem>>, %arg4: memref<28x10xbf16, #tpu.memory_space<vmem>>, %arg5: memref<1x10xf32, #tpu.memory_space<vmem>>, %arg6: memref<2x10xbf16, #tpu.memory_space<vmem>>) attributes {dimension_semantics = [#tpu.dimension_semantics<parallel>], iteration_bounds = array<i64: 1>, scalar_prefetch = 0 : i64, scratch_operands = 0 : i64, tpu.core_type = #tpu.core_type<tc>, window_params = [{transform_indices = @transform_0, window_bounds = array<i64: 2, 28>}, {pipeline_mode = #tpu.pipeline_mode<synchronous>, transform_indices = @transform_1, window_bounds = array<i64: 28, 28>}, {pipeline_mode = #tpu.pipeline_mode<synchronous>, transform_indices = @transform_2, window_bounds = array<i64: 1, 28>}, {pipeline_mode = #tpu.pipeline_mode<synchronous>, transform_indices = @transform_3, window_bounds = array<i64: 28, 10>}, {pipeline_mode = #tpu.pipeline_mode<synchronous>, transform_indices = @transform_4, window_bounds = array<i64: 1, 10>}, {transform_indices = @transform_5, window_bounds = array<i64: 2, 10>}]} {
    %c0 = arith.constant 0 : index
    %c0_0 = arith.constant 0 : index
    %0 = vector.load %arg1[%c0, %c0_0] : memref<2x28xf32, #tpu.memory_space<vmem>>, vector<2x28xf32>
    %1 = arith.truncf %0 : vector<2x28xf32> to vector<2x28xbf16>
    %c0_1 = arith.constant 0 : index
    %c0_2 = arith.constant 0 : index
    %2 = vector.load %arg2[%c0_1, %c0_2] : memref<28x28xbf16, #tpu.memory_space<vmem>>, vector<28x28xbf16>
    %cst = arith.constant dense<0.000000e+00> : vector<2x28xf32>
    %3 = tpu.matmul %1, %2, %cst {dimension_numbers = #tpu.dot_dimension_numbers<[1], [0], [0], [1], [0, 0, 1, 1], [], []>} : vector<2x28xbf16>, vector<28x28xbf16>, vector<2x28xf32> -> vector<2x28xf32>
    %c0_3 = arith.constant 0 : index
    %c0_4 = arith.constant 0 : index
    %4 = vector.load %arg3[%c0_3, %c0_4] : memref<1x28xf32, #tpu.memory_space<vmem>>, vector<1x28xf32>
    %5 = vector.broadcast %4 : vector<1x28xf32> to vector<2x28xf32>
    %6 = arith.addf %3, %5 : vector<2x28xf32>
    %cst_5 = arith.constant 0.000000e+00 : f32
    %7 = vector.broadcast %cst_5 : f32 to vector<2x28xf32>
    %8 = arith.maximumf %6, %7 : vector<2x28xf32>
    %9 = arith.truncf %8 : vector<2x28xf32> to vector<2x28xbf16>
    %c0_6 = arith.constant 0 : index
    %c0_7 = arith.constant 0 : index
    %10 = vector.load %arg4[%c0_6, %c0_7] : memref<28x10xbf16, #tpu.memory_space<vmem>>, vector<28x10xbf16>
    %cst_8 = arith.constant dense<0.000000e+00> : vector<2x10xf32>
    %11 = tpu.matmul %9, %10, %cst_8 {dimension_numbers = #tpu.dot_dimension_numbers<[1], [0], [0], [1], [0, 0, 1, 1], [], []>} : vector<2x28xbf16>, vector<28x10xbf16>, vector<2x10xf32> -> vector<2x10xf32>
    %c0_9 = arith.constant 0 : index
    %c0_10 = arith.constant 0 : index
    %12 = vector.load %arg5[%c0_9, %c0_10] : memref<1x10xf32, #tpu.memory_space<vmem>>, vector<1x10xf32>
    %13 = vector.broadcast %12 : vector<1x10xf32> to vector<2x10xf32>
    %14 = arith.addf %11, %13 : vector<2x10xf32>
    %cst_11 = arith.constant dense<0xFF800000> : vector<2xf32>
    %15 = vector.multi_reduction <maximumf>, %14, %cst_11 [1] : vector<2x10xf32> to vector<2xf32>
    %16 = vector.shape_cast %15 : vector<2xf32> to vector<2x1xf32>
    %17 = vector.broadcast %16 : vector<2x1xf32> to vector<2x10xf32>
    %18 = arith.subf %14, %17 : vector<2x10xf32>
    %19 = math.exp %18 : vector<2x10xf32>
    %cst_12 = arith.constant dense<0.000000e+00> : vector<2xf32>
    %20 = vector.multi_reduction <add>, %19, %cst_12 [1] : vector<2x10xf32> to vector<2xf32>
    %21 = vector.shape_cast %20 : vector<2xf32> to vector<2x1xf32>
    %22 = math.log %21 : vector<2x1xf32>
    %23 = vector.broadcast %22 : vector<2x1xf32> to vector<2x10xf32>
    %24 = arith.subf %18, %23 : vector<2x10xf32>
    %25 = arith.truncf %24 : vector<2x10xf32> to vector<2x10xbf16>
    %c0_13 = arith.constant 0 : index
    %c0_14 = arith.constant 0 : index
    %26 = vector.load %arg6[%c0_13, %c0_14] : memref<2x10xbf16, #tpu.memory_space<vmem>>, vector<2x10xbf16>
    tpu.vector_store %arg6[%c0_13, %c0_14], %25 {strides = array<i32>} : memref<2x10xbf16, #tpu.memory_space<vmem>>, vector<2x10xbf16>,
    return
  }
  func.func @transform_0(%arg0: i32) -> (i32, i32) {
    %c0_i32 = arith.constant 0 : i32
    %c0_i32_0 = arith.constant 0 : i32
    return %arg0, %c0_i32 : i32, i32
  }
  func.func @transform_1(%arg0: i32) -> (i32, i32) {
    %c0_i32 = arith.constant 0 : i32
    %c0_i32_0 = arith.constant 0 : i32
    %c0_i32_1 = arith.constant 0 : i32
    return %c0_i32, %c0_i32_0 : i32, i32
  }
  func.func @transform_2(%arg0: i32) -> (i32, i32) {
    %c0_i32 = arith.constant 0 : i32
    %c0_i32_0 = arith.constant 0 : i32
    %c0_i32_1 = arith.constant 0 : i32
    return %c0_i32, %c0_i32_0 : i32, i32
  }
  func.func @transform_3(%arg0: i32) -> (i32, i32) {
    %c0_i32 = arith.constant 0 : i32
    %c0_i32_0 = arith.constant 0 : i32
    %c0_i32_1 = arith.constant 0 : i32
    return %c0_i32, %c0_i32_0 : i32, i32
  }
  func.func @transform_4(%arg0: i32) -> (i32, i32) {
    %c0_i32 = arith.constant 0 : i32
    %c0_i32_0 = arith.constant 0 : i32
    %c0_i32_1 = arith.constant 0 : i32
    return %c0_i32, %c0_i32_0 : i32, i32
  }
  func.func @transform_5(%arg0: i32) -> (i32, i32) {
    %c0_i32 = arith.constant 0 : i32
    %c0_i32_0 = arith.constant 0 : i32
    return %arg0, %c0_i32 : i32, i32
  }
}

</mosaic_0001>

<llo_original>
// kernel: tpu_custom_call.1
$region0: #{tpu_custom_call.1}
  #allocation0 [shape = 'u32[]', space=smem, size = 0x4, offset = 0x4, fixed_abs, tag = 'smem constant byte address 0x4 - core index']
  #allocation1 [shape = 'u32[144,128]{1,0:T(1,128)}', space=vmem, size = 0x12000, scoped, tag = 'internal scratch']
  %s0 = inlined_call_operand.vmem [shape: f32[2,28], index: 0, kind: input, shape index: {}]
  %s1 = inlined_call_operand.vmem [shape: bf16[28,28], index: 1, kind: input, shape index: {}]
  %s2 = inlined_call_operand.vmem [shape: f32[1,28], index: 2, kind: input, shape index: {}]
  %s3 = inlined_call_operand.vmem [shape: bf16[28,10], index: 3, kind: input, shape index: {}]
  %s4 = inlined_call_operand.vmem [shape: f32[1,10], index: 4, kind: input, shape index: {}]
  %s5 = inlined_call_operand.hbm [shape: bf16[2,10], index: 5, kind: output, shape index: {}]
  %s6 = sld [smem:[#allocation0]]
  $region30: #{tpu_custom_call.1} parent=0
    _
  %s8 = ssub.s32 1, %s6
  %s9 = scalar_select 0, %s8, %s6
  $region1: #{tpu_custom_call.1} parent=0
    #allocation2 [shape = 'u8[512]{0}', space=vmem, size = 0x400, scoped, tag = 'output window, operand 0, single buffered']
    #allocation3 [shape = 's32[1]{0}', space=sflag, size = 0x4, scoped, tag = 'scoped memory for tpu_custom_call.1']
    %10 = vsyncpa [#allocation3], 0
    // Predicated region
    $region2: #{tpu_custom_call.1} parent=1 // pred_check
      _
    $region3: #{tpu_custom_call.1} parent=1 // pred_check_branch
      %12 = sbr.rel (0) target = $region5
    $region4: #{tpu_custom_call.1} parent=1 // pred_region
      _
    $region5: #{tpu_custom_call.1} parent=1 // pred_fallthru
      _
    // Predicated region
    $region6: #{tpu_custom_call.1} parent=1 // pred_check
      _
    $region7: #{tpu_custom_call.1} parent=1 // pred_check_branch
      %14 = sbr.rel (0) target = $region9
    $region8: #{tpu_custom_call.1} parent=1 // pred_region
      _
    $region9: #{tpu_custom_call.1} parent=1 // pred_fallthru
      _
    // Predicated region
    $region10: #{tpu_custom_call.1} parent=1 // pred_check
      _
    $region11: #{tpu_custom_call.1} parent=1 // pred_check_branch
      %16 = sbr.rel (0) target = $region13
    $region12: #{tpu_custom_call.1} parent=1 // pred_region
      _
    $region13: #{tpu_custom_call.1} parent=1 // pred_fallthru
      _
    // Predicated region
    $region14: #{tpu_custom_call.1} parent=1 // pred_check
      _
    $region15: #{tpu_custom_call.1} parent=1 // pred_check_branch
      %18 = sbr.rel (0) target = $region17
    $region16: #{tpu_custom_call.1} parent=1 // pred_region
      _
    $region17: #{tpu_custom_call.1} parent=1 // pred_fallthru
      _
    // Predicated region
    $region18: #{tpu_custom_call.1} parent=1 // pred_check
      _
    $region19: #{tpu_custom_call.1} parent=1 // pred_check_branch
      %20 = sbr.rel (0) target = $region21
    $region20: #{tpu_custom_call.1} parent=1 // pred_region
      _
    $region21: #{tpu_custom_call.1} parent=1 // pred_fallthru
      _
    %v22 = vld [vmem:[%s0] sm:$0x3]
    %v23 = vpack.c.bf16 %v22, %v22
    %v24 = vld [vmem:[%s1] sm:$0xf]
    %v25 = vld [vmem:[%s1 + $0x4] sm:$0xf]
    %v26 = vld [vmem:[%s1 + $0x8] sm:$0xf]
    %v27 = vld [vmem:[%s1 + $0xc] sm:$0x3]
    %v28 = vld [vmem:[%s2] sm:$0x1]
    %v30 = vlaneseq
    %v31 = vshrl.u32 %v30, 7
    %v32 = vsub.s32 0, %v31
    %v33 = vrot.slane %v28, %v32
    %v39 = vunpack.c.l.b16 %v24
    %v40 = vunpack.c.l.b16 %v25
    %v41 = vunpack.c.l.b16 %v26
    %v42 = vunpack.c.l.b16 %v27
    %v43 = vpack.c.b16 %v40, %v39
    %v44 = vpack.c.b16 %v42, %v41
    %vm46 = vcmask 228352
    %v48 = vsel %vm46, %v23, 0
    %vm50 = vcmask 1045504
    %v52 = vsel %vm50, %v44, 0
    %54 = vmatprep.subr.bf16.mxu0 0
    %55 = vmatpush1.bf16.msra.mxu0 %v43
    %56 = vmatprep.subr.bf16.mxu0 0
    %57 = vmatpush1.bf16.msra.mxu0 %v52
    %58 = vmatprep.subr.bf16.mxu0 0
    %59 = vmatpush1.bf16.msra.mxu0 0
    %60 = vmatprep.subr.bf16.mxu0 0
    %61 = vmatpush1.bf16.msra.mxu0 0
    %62 = vmatprep.subr.bf16.mxu0 0
    %63 = vmatpush1.bf16.msra.mxu0 0
    %64 = vmatprep.subr.bf16.mxu0 0
    %65 = vmatpush1.bf16.msra.mxu0 0
    %66 = vmatprep.subr.bf16.mxu0 0
    %67 = vmatpush1.bf16.msra.mxu0 0
    %68 = vmatprep.subr.bf16.mxu0 0
    %69 = vmatpush1.bf16.msra.mxu0 0
    %70 = vmatprep.subr.bf16.mxu0 0
    %71 = vmatpush1.bf16.msra.mxu0 0
    %72 = vmatprep.subr.bf16.mxu0 0
    %73 = vmatpush1.bf16.msra.mxu0 0
    %74 = vmatprep.subr.bf16.mxu0 0
    %75 = vmatpush1.bf16.msra.mxu0 0
    %76 = vmatprep.subr.bf16.mxu0 0
    %77 = vmatpush1.bf16.msra.mxu0 0
    %78 = vmatprep.subr.bf16.mxu0 0
    %79 = vmatpush1.bf16.msra.mxu0 0
    %80 = vmatprep.subr.bf16.mxu0 0
    %81 = vmatpush1.bf16.msra.mxu0 0
    %82 = vmatprep.subr.bf16.mxu0 0
    %83 = vmatpush1.bf16.msra.mxu0 0
    %84 = vmatprep.subr.bf16.mxu0 0
    %85 = vmatpush1.bf16.msra.mxu0 0
    %86 = vmatprep.mubr.bf16.mxu0 0
    %87 = vmatmul.mubr.bf16.gmra.mrb[0].mxu0 %v48
    %v88 = vpop.f32.mrb[0].mxu0
    %v89 = vadd.f32 %v33, %v88
    %v90 = vpop.f32.mrb[0].mxu0
    %v91 = vpop.f32.mrb[0].mxu0
    %v92 = vpop.f32.mrb[0].mxu0
    %93 = vdwg.mxu0
    %v94 = vmax.f32 %v89, 0.0
    %v95 = vpack.c.bf16 %v94, %v94
    %v96 = vld [vmem:[%s3] sm:$0xf]
    %v97 = vld [vmem:[%s3 + $0x4] sm:$0xf]
    %v98 = vld [vmem:[%s3 + $0x8] sm:$0xf]
    %v99 = vld [vmem:[%s3 + $0xc] sm:$0x3]
    %v100 = vld [vmem:[%s4] sm:$0x1]
    %v102 = vlaneseq
    %v103 = vshrl.u32 %v102, 7
    %v104 = vsub.s32 0, %v103
    %v105 = vrot.slane %v100, %v104
    %v111 = vunpack.c.l.b16 %v96
    %v112 = vunpack.c.l.b16 %v97
    %v113 = vunpack.c.l.b16 %v98
    %v114 = vunpack.c.l.b16 %v99
    %v115 = vpack.c.b16 %v112, %v111
    %v116 = vpack.c.b16 %v114, %v113
    %v119 = vsel %vm46, %v95, 0
    %v122 = vsel %vm50, %v116, 0
    %124 = vmatprep.subr.bf16.mxu0 0
    %125 = vmatpush1.bf16.msra.mxu0 %v115
    %126 = vmatprep.subr.bf16.mxu0 0
    %127 = vmatpush1.bf16.msra.mxu0 %v122
    %128 = vmatprep.subr.bf16.mxu0 0
    %129 = vmatpush1.bf16.msra.mxu0 0
    %130 = vmatprep.subr.bf16.mxu0 0
    %131 = vmatpush1.bf16.msra.mxu0 0
    %132 = vmatprep.subr.bf16.mxu0 0
    %133 = vmatpush1.bf16.msra.mxu0 0
    %134 = vmatprep.subr.bf16.mxu0 0
    %135 = vmatpush1.bf16.msra.mxu0 0
    %136 = vmatprep.subr.bf16.mxu0 0
    %137 = vmatpush1.bf16.msra.mxu0 0
    %138 = vmatprep.subr.bf16.mxu0 0
    %139 = vmatpush1.bf16.msra.mxu0 0
    %140 = vmatprep.subr.bf16.mxu0 0
    %141 = vmatpush1.bf16.msra.mxu0 0
    %142 = vmatprep.subr.bf16.mxu0 0
    %143 = vmatpush1.bf16.msra.mxu0 0
    %144 = vmatprep.subr.bf16.mxu0 0
    %145 = vmatpush1.bf16.msra.mxu0 0
    %146 = vmatprep.subr.bf16.mxu0 0
    %147 = vmatpush1.bf16.msra.mxu0 0
    %148 = vmatprep.subr.bf16.mxu0 0
    %149 = vmatpush1.bf16.msra.mxu0 0
    %150 = vmatprep.subr.bf16.mxu0 0
    %151 = vmatpush1.bf16.msra.mxu0 0
    %152 = vmatprep.subr.bf16.mxu0 0
    %153 = vmatpush1.bf16.msra.mxu0 0
    %154 = vmatprep.subr.bf16.mxu0 0
    %155 = vmatpush1.bf16.msra.mxu0 0
    %156 = vmatprep.mubr.bf16.mxu0 0
    %157 = vmatmul.mubr.bf16.gmra.mrb[0].mxu0 %v119
    %v158 = vpop.f32.mrb[0].mxu0
    %v159 = vadd.f32 %v105, %v158
    %v160 = vpop.f32.mrb[0].mxu0
    %v161 = vpop.f32.mrb[0].mxu0
    %v162 = vpop.f32.mrb[0].mxu0
    %163 = vdwg.mxu0
    %vm164 = vcmask 74752
    %v165 = vsel %vm164, %v159, -inf
    %166 = vmax.xlane.f32.xlu0 %v165
    %v167 = vpop.xlane.xlu0 %166
    %v168 = vsub.f32 %v159, %v167
    %v169 = vmul.f32 %v168, 1.442695
    %v170 = vpow.pop %v169
    %v171 = vsel %vm164, %v170, 0.0
    %172 = vadd.xlane.f32.xlu0 %v171
    %v173 = vpop.xlane.xlu0 %172
    %v174 = vlog2.pop %v173
    %v175 = vmul.f32 %v174, 0.6931472
    %v176 = vsub.f32 %v168, %v175
    %v177 = vpack.c.bf16 %v176, %v176
    %vm178 = vcmask 73728
    %179 = vst.msk [vmem:[#allocation2] sm:$0x1] %vm178, %v177
    // Predicated region
    $region22: #{tpu_custom_call.1} parent=1 // pred_check
      _
    $region23: #{tpu_custom_call.1} parent=1 // pred_check_branch
      %181 = sbr.rel (0) target = $region25
    $region24: #{tpu_custom_call.1} parent=1 // pred_region
      %s183 = ssub.s32 16, 16
      %184 = vsyncadd [#allocation3], %s183
      %s186 = sshll.u32 [#allocation2], 4
      %s187 = int_to_ptr.vmem [resolvable:$true] %s186
      %189 = dma.vmem_to_hbm [thread:$0]  %s187, 16, %s5, [#allocation3]
    $region25: #{tpu_custom_call.1} parent=1 // pred_fallthru
      _
    // Predicated region
    $region26: #{tpu_custom_call.1} parent=1 // pred_check
      _
    $region27: #{tpu_custom_call.1} parent=1 // pred_check_branch
      %191 = sbr.rel (0) target = $region29
    $region28: #{tpu_custom_call.1} parent=1 // pred_region
      %192 = dma.done [#allocation3], 16
    $region29: #{tpu_custom_call.1} parent=1 // pred_fallthru
      _
    %193 = vsyncpa [#allocation3], 1

</llo_original>
